<compile_context>
chip_gen: v5e
topology: v5e:2x2
jax: 0.10.0
libtpu: 0.0.40
codegen_flags: <defaults>
</compile_context>

<pallas_src>
import jax
import jax.numpy as jnp
from jax.experimental import pallas as pl
from jax.experimental.pallas import tpu as pltpu


def _min_sublane(dtype):
    """Minimum sublane tile for a dtype (f32: 8, bf16: 16, int8/fp8: 32)."""
    return {4: 8, 2: 16, 1: 32}.get(jnp.dtype(dtype).itemsize, 8)


def _choose_tile_n(n, c, x_dtype, t_dtype):
    """Largest batch tile that fits an explicit (v7x-safe) VMEM budget."""
    x_bytes = jnp.dtype(x_dtype).itemsize
    t_bytes = jnp.dtype(t_dtype).itemsize
    # Sublane rounding must satisfy the *narrowest* dtype's minimum tile.
    sublane = max(_min_sublane(x_dtype), _min_sublane(t_dtype))

    # VMEM budget: 2 pipeline buffers per input + ~3 tile-sized f32
    # temporaries in the compute region (upcast logits, exp(x-m), product).
    vmem_budget = 40 << 20                      # cap well under v7x's 64 MiB
    bytes_per_row = c * (2 * x_bytes + 2 * t_bytes + 3 * 4)
    rows_budget = max(vmem_budget // max(bytes_per_row, 1), 1)

    # ~4 MiB per input block amortizes the ~0.35 us/step grid overhead even
    # at v7x's ~3.2 TB/s; v5e/v6e are already on the roofline plateau there.
    target_block_bytes = 4 << 20
    rows_target = max(target_block_bytes // max(c * max(x_bytes, t_bytes), 1), 1)

    rows = min(rows_budget, rows_target)
    rows = max((rows // sublane) * sublane, sublane)

    # Never larger than needed to cover the whole batch in one tile.
    # (No artificial minimum grid: on v5e/v6e extra steps are pure overhead;
    #  on v7x large N naturally yields >=2 steps for megacore sharding.)
    rows = min(rows, ((n + sublane - 1) // sublane) * sublane)
    return rows


def _make_ce_kernel(n, tile_n, ragged):
    """Kernel: one batch tile -> one scalar partial loss (lane-dense block)."""

    def kernel(x_ref, t_ref, loss_ref):
        x = x_ref[...].astype(jnp.float32)                 # (tile_n, C)
        t = t_ref[...]                                     # native dtype

        if ragged:
            # Static N: mask tail rows of the last (partial) tile so padded
            # garbage cannot reach max/exp/log or the t-weighted sum.
            row = (jax.lax.broadcasted_iota(jnp.int32, (tile_n, 1), 0)
                   + pl.program_id(0) * tile_n)
            valid = row < n                                # (tile_n, 1)
            x = jnp.where(valid, x, 0.0)
            t = jnp.where(valid, t, jnp.zeros((), t.dtype))

        # Numerically stable log-softmax pieces along the class (lane) axis.
        m = jnp.max(x, axis=-1, keepdims=True)             # (tile_n, 1)
        lse = jnp.log(jnp.sum(jnp.exp(x - m), axis=-1, keepdims=True))
        logp = x - (m + lse)                               # log_softmax(x)

        # Single sweep over the targets tile.
        row_loss = jnp.sum(t.astype(jnp.float32) * logp, axis=-1,
                           keepdims=True)                  # (tile_n, 1)
        tile_loss = -jnp.sum(row_loss)                     # scalar

        # Lane-dense (1, 1, 128) writeback: unmasked store, ~zero cost.
        loss_ref[...] = jnp.full(loss_ref.shape, tile_loss, dtype=jnp.float32)

    return kernel


def one_hot_cross_entropy(outputs, targets, *, tile_n=None):
    """outputs, targets: [N, C].  Returns scalar float32 loss."""
    outputs = jnp.asarray(outputs)
    targets = jnp.asarray(targets)
    n, c = outputs.shape
    assert targets.shape == (n, c)

    if tile_n is None:
        tile_n = _choose_tile_n(n, c, outputs.dtype, targets.dtype)

    grid_n = -(-n // tile_n)                 # ceil(N / tile_n)
    ragged = (n % tile_n) != 0

    partials = pl.pallas_call(
        _make_ce_kernel(n, tile_n, ragged),
        out_shape=jax.ShapeDtypeStruct((grid_n, 1, 128), jnp.float32),
        grid_spec=pltpu.PrefetchScalarGridSpec(
            num_scalar_prefetch=0,
            grid=(grid_n,),
            in_specs=[
                pl.BlockSpec((tile_n, c), lambda i: (i, 0)),
                pl.BlockSpec((tile_n, c), lambda i: (i, 0)),
            ],
            # One private block per grid step -> truly parallel axis.
            out_specs=pl.BlockSpec((1, 1, 128), lambda i: (i, 0, 0)),
        ),
        compiler_params=pltpu.CompilerParams(
            dimension_semantics=("parallel",),
            # Tile choice above already fits a 40 MiB budget (v7x headroom).
            vmem_limit_bytes=40 * 1024 * 1024,
        ),
    )(outputs, targets)

    # Cheap final reduction over per-tile partial losses.
    return jnp.sum(partials[:, 0, 0])


if __name__ == "__main__":
    key = jax.random.PRNGKey(0)
    k1, k2, k3, k4, k5, k6 = jax.random.split(key, 6)

    # --- Test 1: one-hot targets, small shape (batch=16, classes=32) ---
    N, C = 16, 32
    outputs = jax.random.normal(k1, (N, C), dtype=jnp.float32)
    labels = jax.random.randint(k2, (N,), 0, C)
    targets = jax.nn.one_hot(labels, C, dtype=jnp.float32)

    loss = jax.block_until_ready(one_hot_cross_entropy(outputs, targets))
    ref = -jnp.sum(targets * jax.nn.log_softmax(outputs, axis=1))
    assert jnp.allclose(loss, ref, rtol=1e-5, atol=1e-4), (loss, ref)

    # --- Test 2: soft targets, batch not divisible by the tile (masking) ---
    N2, C2 = 13, 32
    outputs2 = jax.random.normal(k3, (N2, C2), dtype=jnp.float32)
    targets2 = jax.nn.softmax(
        jax.random.normal(k4, (N2, C2), dtype=jnp.float32), axis=1)
    loss2 = jax.block_until_ready(one_hot_cross_entropy(outputs2, targets2))
    ref2 = -jnp.sum(targets2 * jax.nn.log_softmax(outputs2, axis=1))
    assert jnp.allclose(loss2, ref2, rtol=1e-5, atol=1e-4), (loss2, ref2)

    # --- Test 3: multi-tile ragged grid (explicit tile_n=8, batch=20) ---
    N3, C3 = 20, 32
    outputs3 = jax.random.normal(k5, (N3, C3), dtype=jnp.float32)
    targets3 = jax.nn.softmax(
        jax.random.normal(k6, (N3, C3), dtype=jnp.float32), axis=1)
    loss3 = jax.block_until_ready(
        one_hot_cross_entropy(outputs3, targets3, tile_n=8))
    ref3 = -jnp.sum(targets3 * jax.nn.log_softmax(outputs3, axis=1))
    assert jnp.allclose(loss3, ref3, rtol=1e-5, atol=1e-4), (loss3, ref3)

    print("KERNEL_OK")
</pallas_src>

<mosaic_0001>
module attributes {stable_mosaic.version = 11 : i64} {
  func.func @kernel(%arg0: i32, %arg1: memref<16x32xf32, #tpu.memory_space<vmem>>, %arg2: memref<16x32xf32, #tpu.memory_space<vmem>>, %arg3: memref<1x1x128xf32, #tpu.memory_space<vmem>>) attributes {dimension_semantics = [#tpu.dimension_semantics<parallel>], iteration_bounds = array<i64: 1>, scalar_prefetch = 0 : i64, scratch_operands = 0 : i64, tpu.core_type = #tpu.core_type<tc>, window_params = [{transform_indices = @transform_0, window_bounds = array<i64: 16, 32>}, {transform_indices = @transform_1, window_bounds = array<i64: 16, 32>}, {transform_indices = @transform_2, window_bounds = array<i64: 1, 1, 128>}]} {
    %c0 = arith.constant 0 : index
    %c0_0 = arith.constant 0 : index
    %0 = vector.load %arg1[%c0, %c0_0] : memref<16x32xf32, #tpu.memory_space<vmem>>, vector<16x32xf32>
    %c0_1 = arith.constant 0 : index
    %c0_2 = arith.constant 0 : index
    %1 = vector.load %arg2[%c0_1, %c0_2] : memref<16x32xf32, #tpu.memory_space<vmem>>, vector<16x32xf32>
    %cst = arith.constant dense<0xFF800000> : vector<16xf32>
    %2 = vector.multi_reduction <maximumf>, %0, %cst [1] : vector<16x32xf32> to vector<16xf32>
    %3 = vector.shape_cast %2 : vector<16xf32> to vector<16x1xf32>
    %4 = vector.broadcast %3 : vector<16x1xf32> to vector<16x32xf32>
    %5 = arith.subf %0, %4 : vector<16x32xf32>
    %6 = math.exp %5 : vector<16x32xf32>
    %cst_3 = arith.constant dense<0.000000e+00> : vector<16xf32>
    %7 = vector.multi_reduction <add>, %6, %cst_3 [1] : vector<16x32xf32> to vector<16xf32>
    %8 = vector.shape_cast %7 : vector<16xf32> to vector<16x1xf32>
    %9 = math.log %8 : vector<16x1xf32>
    %10 = arith.addf %3, %9 : vector<16x1xf32>
    %11 = vector.broadcast %10 : vector<16x1xf32> to vector<16x32xf32>
    %12 = arith.subf %0, %11 : vector<16x32xf32>
    %13 = arith.mulf %1, %12 : vector<16x32xf32>
    %cst_4 = arith.constant dense<0.000000e+00> : vector<16xf32>
    %14 = vector.multi_reduction <add>, %13, %cst_4 [1] : vector<16x32xf32> to vector<16xf32>
    %15 = vector.shape_cast %14 : vector<16xf32> to vector<16x1xf32>
    %16 = vector.shape_cast %15 : vector<16x1xf32> to vector<1x16x1xf32>
    %cst_5 = arith.constant dense<0.000000e+00> : vector<1xf32>
    %17 = vector.multi_reduction <add>, %16, %cst_5 [1, 2] : vector<1x16x1xf32> to vector<1xf32>
    %18 = vector.shape_cast %17 : vector<1xf32> to vector<1x1x1xf32>
    %19 = vector.extract %18[0, 0, 0] : f32 from vector<1x1x1xf32>
    %cst_6 = arith.constant 0.000000e+00 : f32
    %20 = arith.subf %cst_6, %19 : f32
    %21 = vector.broadcast %20 : f32 to vector<1x1x128xf32>
    %c0_7 = arith.constant 0 : index
    %c0_8 = arith.constant 0 : index
    %c0_9 = arith.constant 0 : index
    %22 = vector.load %arg3[%c0_7, %c0_8, %c0_9] : memref<1x1x128xf32, #tpu.memory_space<vmem>>, vector<1x1x128xf32>
    tpu.vector_store %arg3[%c0_7, %c0_8, %c0_9], %21 {strides = array<i32>} : memref<1x1x128xf32, #tpu.memory_space<vmem>>, vector<1x1x128xf32>,
    return
  }
  func.func @transform_0(%arg0: i32) -> (i32, i32) {
    %c0_i32 = arith.constant 0 : i32
    %c0_i32_0 = arith.constant 0 : i32
    return %arg0, %c0_i32 : i32, i32
  }
  func.func @transform_1(%arg0: i32) -> (i32, i32) {
    %c0_i32 = arith.constant 0 : i32
    %c0_i32_0 = arith.constant 0 : i32
    return %arg0, %c0_i32 : i32, i32
  }
  func.func @transform_2(%arg0: i32) -> (i32, i32, i32) {
    %c0_i32 = arith.constant 0 : i32
    %c0_i32_0 = arith.constant 0 : i32
    %c0_i32_1 = arith.constant 0 : i32
    return %arg0, %c0_i32, %c0_i32_0 : i32, i32, i32
  }
}

</mosaic_0001>

<llo_original>
// kernel: tpu_custom_call.1
$region0: #{tpu_custom_call.1}
  #allocation0 [shape = 'u32[]', space=smem, size = 0x4, offset = 0x4, fixed_abs, tag = 'smem constant byte address 0x4 - core index']
  #allocation1 [shape = 'u32[72,128]{1,0:T(1,128)}', space=vmem, size = 0x9000, scoped, tag = 'internal scratch']
  %s0 = inlined_call_operand.hbm [shape: f32[16,32], index: 0, kind: input, shape index: {}]
  %s1 = inlined_call_operand.hbm [shape: f32[16,32], index: 1, kind: input, shape index: {}]
  %s2 = inlined_call_operand.hbm [shape: f32[1,1,128], index: 2, kind: output, shape index: {}]
  %s3 = sld [smem:[#allocation0]]
  $region26: #{tpu_custom_call.1} parent=0
    _
  %s5 = ssub.s32 1, %s3
  %s6 = scalar_select 0, %s5, %s3
  $region1: #{tpu_custom_call.1} parent=0
    #allocation2 [shape = 'u8[8192]{0}', space=vmem, size = 0x2000, scoped, tag = 'input window, operand 0, single buffered']
    #allocation3 [shape = 's32[1]{0}', space=sflag, size = 0x4, scoped, tag = 'scoped memory for tpu_custom_call.1']
    #allocation4 [shape = 's32[1]{0}', space=sflag, size = 0x4, scoped, tag = 'scoped memory for tpu_custom_call.1']
    #allocation5 [shape = 'u8[8192]{0}', space=vmem, size = 0x2000, scoped, tag = 'input window, operand 1, single buffered']
    #allocation6 [shape = 's32[1]{0}', space=sflag, size = 0x4, scoped, tag = 'scoped memory for tpu_custom_call.1']
    #allocation7 [shape = 'u8[512]{0}', space=vmem, size = 0x400, scoped, tag = 'output window, operand 0, single buffered']
    %7 = vsyncpa [#allocation3], 0
    %8 = vsyncpa [#allocation6], 0
    %9 = vsyncpa [#allocation4], 0
    // Predicated region
    $region2: #{tpu_custom_call.1} parent=1 // pred_check
      _
    $region3: #{tpu_custom_call.1} parent=1 // pred_check_branch
      %11 = sbr.rel (0) target = $region5
    $region4: #{tpu_custom_call.1} parent=1 // pred_region
      %13 = vsyncadd [#allocation3], 0
      %s14 = sshll.u32 %s0, 4
      %s15 = int_to_ptr.hbm [resolvable:$true] %s14
      %s16 = sshll.u32 [#allocation2], 4
      %s17 = int_to_ptr.vmem [resolvable:$true] %s16
      %22 = dma.hbm_to_vmem [thread:$0]  %s15, 256, %s17, [#allocation3], 128, 128, 8
    $region5: #{tpu_custom_call.1} parent=1 // pred_fallthru
      _
    // Predicated region
    $region6: #{tpu_custom_call.1} parent=1 // pred_check
      _
    $region7: #{tpu_custom_call.1} parent=1 // pred_check_branch
      %24 = sbr.rel (0) target = $region9
    $region8: #{tpu_custom_call.1} parent=1 // pred_region
      %26 = vsyncadd [#allocation6], 0
      %s27 = sshll.u32 %s1, 4
      %s28 = int_to_ptr.hbm [resolvable:$true] %s27
      %s29 = sshll.u32 [#allocation5], 4
      %s30 = int_to_ptr.vmem [resolvable:$true] %s29
      %35 = dma.hbm_to_vmem [thread:$0]  %s28, 256, %s30, [#allocation6], 128, 128, 8
    $region9: #{tpu_custom_call.1} parent=1 // pred_fallthru
      _
    // Predicated region
    $region10: #{tpu_custom_call.1} parent=1 // pred_check
      _
    $region11: #{tpu_custom_call.1} parent=1 // pred_check_branch
      %37 = sbr.rel (0) target = $region13
    $region12: #{tpu_custom_call.1} parent=1 // pred_region
      %39 = dma.done [#allocation3], 256
    $region13: #{tpu_custom_call.1} parent=1 // pred_fallthru
      _
    // Predicated region
    $region14: #{tpu_custom_call.1} parent=1 // pred_check
      _
    $region15: #{tpu_custom_call.1} parent=1 // pred_check_branch
      %41 = sbr.rel (0) target = $region17
    $region16: #{tpu_custom_call.1} parent=1 // pred_region
      %43 = dma.done [#allocation6], 256
    $region17: #{tpu_custom_call.1} parent=1 // pred_fallthru
      _
    %v44 = vld [vmem:[#allocation2] sm:$0xff]
    %v45 = vld [vmem:[#allocation2 + $0x8] sm:$0xff]
    %v46 = vld [vmem:[#allocation5] sm:$0xff]
    %v47 = vld [vmem:[#allocation5 + $0x8] sm:$0xff]
    %vm48 = vcmask 261120
    %v49 = vsel %vm48, %v44, -inf
    %50 = vmax.xlane.f32.xlu0 %v49
    %v51 = vpop.xlane.xlu0 %50
    %v52 = vsel %vm48, %v45, -inf
    %53 = vmax.xlane.f32.xlu0 %v52
    %v54 = vpop.xlane.xlu0 %53
    %v55 = vsub.f32 %v44, %v51
    %v56 = vsub.f32 %v45, %v54
    %v57 = vmul.f32 %v55, 1.442695
    %v58 = vpow.pop %v57
    %v59 = vmul.f32 %v56, 1.442695
    %v60 = vpow.pop %v59
    %v61 = vsel %vm48, %v58, 0.0
    %62 = vadd.xlane.f32.xlu0 %v61
    %v63 = vpop.xlane.xlu0 %62
    %v64 = vsel %vm48, %v60, 0.0
    %65 = vadd.xlane.f32.xlu0 %v64
    %v66 = vpop.xlane.xlu0 %65
    %v67 = vlog2.pop %v63
    %v68 = vmul.f32 %v67, 0.6931472
    %v69 = vlog2.pop %v66
    %v70 = vmul.f32 %v69, 0.6931472
    %v71 = vadd.f32 %v51, %v68
    %v72 = vadd.f32 %v54, %v70
    %v73 = vsub.f32 %v44, %v71
    %v74 = vsub.f32 %v45, %v72
    %v75 = vmul.f32 %v46, %v73
    %v76 = vmul.f32 %v47, %v74
    %v77 = vsel %vm48, %v75, 0.0
    %78 = vadd.xlane.f32.xlu0 %v77
    %v79 = vpop.xlane.xlu0 %78
    %v80 = vsel %vm48, %v76, 0.0
    %81 = vadd.xlane.f32.xlu0 %v80
    %v82 = vpop.xlane.xlu0 %81
    %vm83 = vcmask 7168
    %v84 = vsel %vm83, %v79, 0.0
    %v85 = vsel %vm83, %v82, 0.0
    %v86 = vadd.f32 %v84, %v85
    %87 = vadd.xlane.f32.xlu0 %v86
    %v88 = vpop.xlane.xlu0 %87
    %v89 = vrot.slane %v88, 4
    %v90 = vadd.f32 %v88, %v89
    %v91 = vrot.slane %v90, 2
    %v92 = vadd.f32 %v90, %v91
    %v93 = vrot.slane %v92, 1
    %v94 = vadd.f32 %v92, %v93
    %s95 = vtos %v94
    %s96 = ssub.f32 0.0, %s95
    %v97 = vstv %s96
    %98 = vst [vmem:[#allocation7] sm:$0x1] %v97
    // Predicated region
    $region18: #{tpu_custom_call.1} parent=1 // pred_check
      _
    $region19: #{tpu_custom_call.1} parent=1 // pred_check_branch
      %100 = sbr.rel (0) target = $region21
    $region20: #{tpu_custom_call.1} parent=1 // pred_region
      %102 = vsyncadd [#allocation4], 0
      %s104 = sshll.u32 [#allocation7], 4
      %s105 = int_to_ptr.vmem [resolvable:$true] %s104
      %s106 = sshll.u32 %s2, 4
      %s107 = int_to_ptr.hbm [resolvable:$true] %s106
      %109 = dma.vmem_to_hbm [thread:$0]  %s105, 16, %s107, [#allocation4]
    $region21: #{tpu_custom_call.1} parent=1 // pred_fallthru
      _
    // Predicated region
    $region22: #{tpu_custom_call.1} parent=1 // pred_check
      _
    $region23: #{tpu_custom_call.1} parent=1 // pred_check_branch
      %111 = sbr.rel (0) target = $region25
    $region24: #{tpu_custom_call.1} parent=1 // pred_region
      %113 = dma.done [#allocation4], 16
    $region25: #{tpu_custom_call.1} parent=1 // pred_fallthru
      _
    %114 = vsyncpa [#allocation3], 1
    %115 = vsyncpa [#allocation6], 1
    %116 = vsyncpa [#allocation4], 1

</llo_original>
